<compile_context>
chip_gen: v7x
topology: tpu7x:2x2x1
jax: 0.10.0
libtpu: 0.0.40
codegen_flags: <defaults>
</compile_context>

<pallas_src>
import functools

import jax
import jax.numpy as jnp
from jax.experimental import pallas as pl
from jax.experimental.pallas import tpu as pltpu


def bert_pooler_kernel(x_ref, w_ref, b_ref, out_ref):
    # x_ref: [tile_b, H] bf16 CLS rows; w_ref: [H, H] bf16; b_ref: [1, H] f32.
    acc = jnp.dot(x_ref[...], w_ref[...],
                  preferred_element_type=jnp.float32)    # MXU, f32 accumulate
    acc = acc + b_ref[...]                               # f32 bias add (broadcast)
    out_ref[...] = jnp.tanh(acc).astype(out_ref.dtype)   # tanh on EUP, f32


def _pick_tile_b(batch, hidden, out_bytes):
    """Largest batch tile that keeps the VMEM working set ~<= 24 MiB (v7x-safe)."""
    budget = 24 * 1024 * 1024
    resident = hidden * hidden * 2 + hidden * 4        # bf16 weight + f32 bias, single-buffered
    per_row = hidden * (2 * 2 + 2 * out_bytes)          # double-buffered bf16 in + out rows
    avail = max(budget - resident, 16 * per_row)
    tile = min(1024, max(16, avail // per_row))
    tile = (tile // 16) * 16                             # bf16 sublane multiple
    if tile >= batch:
        if batch >= 32:
            # Guarantee >= 2 grid steps so the "parallel" axis spans both v7x TCs.
            tile = ((pl.cdiv(batch, 2) + 15) // 16) * 16
        else:
            tile = batch                                  # full-dim block is always legal
    return int(tile)


@functools.partial(jax.jit, static_argnames=("tile_b",))
def bert_pooler(hidden_states, weight, bias, *, tile_b=None):
    """hidden_states: [B, S, H]; weight: [H, H] stored as (in, out); bias: [H].

    Matches PyTorch nn.Linear with W = weight.T, i.e. out = tanh(x @ W + b).
    """
    B, S, H = hidden_states.shape
    out_dtype = hidden_states.dtype
    out_bytes = jnp.dtype(out_dtype).itemsize

    # Fused in this jit: CLS slice (only B*H elements ever reach the kernel)
    # and bf16 operand casts for the MXU.
    x = hidden_states[:, 0, :].astype(jnp.bfloat16)      # [B, H]
    w = weight.astype(jnp.bfloat16)                      # [H, H]
    b2 = bias.reshape(1, H).astype(jnp.float32)          # [1, H]

    if tile_b is None:
        tile_b = _pick_tile_b(B, H, out_bytes)
    tile_b = min(tile_b, B)
    grid = (pl.cdiv(B, tile_b),)

    cost = pl.CostEstimate(
        flops=2 * B * H * H,
        transcendentals=B * H,
        bytes_accessed=B * H * 2 + H * H * 2 + H * 4 + B * H * out_bytes,
    )

    return pl.pallas_call(
        bert_pooler_kernel,
        out_shape=jax.ShapeDtypeStruct((B, H), out_dtype),
        grid_spec=pl.GridSpec(
            grid=grid,
            in_specs=[
                # Activations: tiled over batch, pipelined (double-buffered).
                pl.BlockSpec((tile_b, H), lambda i: (i, 0)),
                # Weight: constant index_map -> resident in VMEM across tiles;
                # single buffer (no double-buffering of an invariant block).
                pl.BlockSpec((H, H), lambda i: (0, 0),
                             pipeline_mode=pl.Buffered(buffer_count=1)),
                # Bias: same treatment.
                pl.BlockSpec((1, H), lambda i: (0, 0),
                             pipeline_mode=pl.Buffered(buffer_count=1)),
            ],
            out_specs=pl.BlockSpec((tile_b, H), lambda i: (i, 0)),
        ),
        compiler_params=pltpu.CompilerParams(
            dimension_semantics=("parallel",)),
        cost_estimate=cost,
    )(x, w, b2)


if __name__ == "__main__":
    B, S, H = 2, 8, 32  # small shapes consistent with config.hidden_size = 32
    key = jax.random.PRNGKey(0)
    k_hs, k_w, k_b = jax.random.split(key, 3)

    hidden_states = jax.random.normal(k_hs, (B, S, H), dtype=jnp.float32)
    # Deterministic parameter init (nn.Linear default-ish uniform scale).
    bound = 1.0 / (H ** 0.5)
    weight = jax.random.uniform(k_w, (H, H), dtype=jnp.float32,
                                minval=-bound, maxval=bound)
    bias = jax.random.uniform(k_b, (H,), dtype=jnp.float32,
                              minval=-bound, maxval=bound)

    out = jax.block_until_ready(bert_pooler(hidden_states, weight, bias))

    # Reference checks in plain JAX.
    # (1) Same bf16-operand / f32-accumulate recipe -> tight tolerance.
    ref_bf16 = jnp.tanh(
        jnp.dot(hidden_states[:, 0, :].astype(jnp.bfloat16),
                weight.astype(jnp.bfloat16),
                preferred_element_type=jnp.float32) + bias)
    # (2) Exact f32 reference -> loose tolerance (bf16 operand rounding).
    ref_f32 = jnp.tanh(hidden_states[:, 0, :] @ weight + bias)

    assert out.shape == (B, H)
    assert out.dtype == hidden_states.dtype
    assert jnp.allclose(out, ref_bf16, atol=1e-5, rtol=1e-5), (
        float(jnp.max(jnp.abs(out - ref_bf16))))
    assert jnp.allclose(out, ref_f32, atol=5e-2, rtol=5e-2), (
        float(jnp.max(jnp.abs(out - ref_f32))))
    print("KERNEL_OK")
</pallas_src>

<mosaic_0001>
module attributes {stable_mosaic.version = 11 : i64} {
  func.func @bert_pooler_kernel(%arg0: i32, %arg1: memref<2x32xbf16, #tpu.memory_space<vmem>>, %arg2: memref<32x32xbf16, #tpu.memory_space<vmem>>, %arg3: memref<1x32xf32, #tpu.memory_space<vmem>>, %arg4: memref<2x32xf32, #tpu.memory_space<vmem>>) attributes {dimension_semantics = [#tpu.dimension_semantics<parallel>], iteration_bounds = array<i64: 1>, scalar_prefetch = 0 : i64, scratch_operands = 0 : i64, tpu.core_type = #tpu.core_type<tc>, window_params = [{transform_indices = @transform_0, window_bounds = array<i64: 2, 32>}, {pipeline_mode = #tpu.pipeline_mode<synchronous>, transform_indices = @transform_1, window_bounds = array<i64: 32, 32>}, {pipeline_mode = #tpu.pipeline_mode<synchronous>, transform_indices = @transform_2, window_bounds = array<i64: 1, 32>}, {transform_indices = @transform_3, window_bounds = array<i64: 2, 32>}]} {
    %c0 = arith.constant 0 : index
    %c0_0 = arith.constant 0 : index
    %0 = vector.load %arg1[%c0, %c0_0] : memref<2x32xbf16, #tpu.memory_space<vmem>>, vector<2x32xbf16>
    %c0_1 = arith.constant 0 : index
    %c0_2 = arith.constant 0 : index
    %1 = vector.load %arg2[%c0_1, %c0_2] : memref<32x32xbf16, #tpu.memory_space<vmem>>, vector<32x32xbf16>
    %cst = arith.constant dense<0.000000e+00> : vector<2x32xf32>
    %2 = tpu.matmul %0, %1, %cst {dimension_numbers = #tpu.dot_dimension_numbers<[1], [0], [0], [1], [0, 0, 1, 1], [], []>} : vector<2x32xbf16>, vector<32x32xbf16>, vector<2x32xf32> -> vector<2x32xf32>
    %c0_3 = arith.constant 0 : index
    %c0_4 = arith.constant 0 : index
    %3 = vector.load %arg3[%c0_3, %c0_4] : memref<1x32xf32, #tpu.memory_space<vmem>>, vector<1x32xf32>
    %4 = vector.broadcast %3 : vector<1x32xf32> to vector<2x32xf32>
    %5 = arith.addf %2, %4 : vector<2x32xf32>
    %6 = math.tanh %5 : vector<2x32xf32>
    %c0_5 = arith.constant 0 : index
    %c0_6 = arith.constant 0 : index
    %7 = vector.load %arg4[%c0_5, %c0_6] : memref<2x32xf32, #tpu.memory_space<vmem>>, vector<2x32xf32>
    tpu.vector_store %arg4[%c0_5, %c0_6], %6 {strides = array<i32>} : memref<2x32xf32, #tpu.memory_space<vmem>>, vector<2x32xf32>,
    return
  }
  func.func @transform_0(%arg0: i32) -> (i32, i32) {
    %c0_i32 = arith.constant 0 : i32
    %c0_i32_0 = arith.constant 0 : i32
    return %arg0, %c0_i32 : i32, i32
  }
  func.func @transform_1(%arg0: i32) -> (i32, i32) {
    %c0_i32 = arith.constant 0 : i32
    %c0_i32_0 = arith.constant 0 : i32
    %c0_i32_1 = arith.constant 0 : i32
    return %c0_i32, %c0_i32_0 : i32, i32
  }
  func.func @transform_2(%arg0: i32) -> (i32, i32) {
    %c0_i32 = arith.constant 0 : i32
    %c0_i32_0 = arith.constant 0 : i32
    %c0_i32_1 = arith.constant 0 : i32
    return %c0_i32, %c0_i32_0 : i32, i32
  }
  func.func @transform_3(%arg0: i32) -> (i32, i32) {
    %c0_i32 = arith.constant 0 : i32
    %c0_i32_0 = arith.constant 0 : i32
    return %arg0, %c0_i32 : i32, i32
  }
}

</mosaic_0001>

<llo_original>
// kernel: bert_pooler.1
$region0: #{bert_pooler.1}
  #allocation0 [shape = 'u32[]', space=smem, size = 0x4, offset = 0x4, fixed_abs, tag = 'smem constant byte address 0x4 - core index']
  #allocation1 [shape = 'u32[144,128]{1,0:T(1,128)}', space=vmem, size = 0x12000, scoped, tag = 'internal scratch']
  %s0 = inlined_call_operand.vmem [shape: bf16[2,32], index: 0, kind: input, shape index: {}]
  %s1 = inlined_call_operand.vmem [shape: bf16[32,32], index: 1, kind: input, shape index: {}]
  %s2 = inlined_call_operand.vmem [shape: f32[1,32], index: 2, kind: input, shape index: {}]
  %s3 = inlined_call_operand.hbm [shape: f32[2,32], index: 3, kind: output, shape index: {}]
  %s4 = sld [smem:[#allocation0]]
  $region22: #{bert_pooler.1} parent=0
    _
  %s6 = ssub.s32 1, %s4
  %s7 = scalar_select 0, %s6, %s4
  $region1: #{bert_pooler.1} parent=0
    #allocation2 [shape = 'u8[1024]{0}', space=vmem, size = 0x400, scoped, tag = 'output window, operand 0, single buffered']
    #allocation3 [shape = 's32[1]{0}', space=sflag, size = 0x4, scoped, tag = 'scoped memory for bert_pooler.1']
    %8 = vsyncpa [#allocation3], 0
    // Predicated region
    $region2: #{bert_pooler.1} parent=1 // pred_check
      _
    $region3: #{bert_pooler.1} parent=1 // pred_check_branch
      %10 = sbr.rel (0) target = $region5
    $region4: #{bert_pooler.1} parent=1 // pred_region
      _
    $region5: #{bert_pooler.1} parent=1 // pred_fallthru
      _
    // Predicated region
    $region6: #{bert_pooler.1} parent=1 // pred_check
      _
    $region7: #{bert_pooler.1} parent=1 // pred_check_branch
      %12 = sbr.rel (0) target = $region9
    $region8: #{bert_pooler.1} parent=1 // pred_region
      _
    $region9: #{bert_pooler.1} parent=1 // pred_fallthru
      _
    // Predicated region
    $region10: #{bert_pooler.1} parent=1 // pred_check
      _
    $region11: #{bert_pooler.1} parent=1 // pred_check_branch
      %14 = sbr.rel (0) target = $region13
    $region12: #{bert_pooler.1} parent=1 // pred_region
      _
    $region13: #{bert_pooler.1} parent=1 // pred_fallthru
      _
    %v16 = vld [vmem:[%s0] sm:$0x1]
    %v17 = vld [vmem:[%s1] sm:$0xf]
    %v18 = vld [vmem:[%s1 + $0x4] sm:$0xf]
    %v19 = vld [vmem:[%s1 + $0x8] sm:$0xf]
    %v20 = vld [vmem:[%s1 + $0xc] sm:$0xf]
    %v21 = vld [vmem:[%s2] sm:$0x1]
    %v23 = vlaneseq
    %v24 = vshrl.u32 %v23, 7
    %v25 = vsub.s32 0, %v24
    %v26 = vrot.slane %v21, %v25
    %v32 = vunpack.c.l.b16 %v17
    %v33 = vunpack.c.l.b16 %v18
    %v34 = vunpack.c.l.b16 %v19
    %v35 = vunpack.c.l.b16 %v20
    %v36 = vpack.c.b16 %v33, %v32
    %v37 = vpack.c.b16 %v35, %v34
    %vm40 = vcmask 261120
    %v42 = vsel %vm40, %v16, 0
    %44 = vmatprep.subr.bf16.mxu0 0
    %45 = vmatpush1.bf16.msra.mxu0 %v36
    %46 = vmatprep.subr.bf16.mxu0 0
    %47 = vmatpush1.bf16.msra.mxu0 %v37
    %48 = vmatprep.subr.bf16.mxu0 0
    %49 = vmatpush1.bf16.msra.mxu0 0
    %50 = vmatprep.subr.bf16.mxu0 0
    %51 = vmatpush1.bf16.msra.mxu0 0
    %52 = vmatprep.subr.bf16.mxu0 0
    %53 = vmatpush1.bf16.msra.mxu0 0
    %54 = vmatprep.subr.bf16.mxu0 0
    %55 = vmatpush1.bf16.msra.mxu0 0
    %56 = vmatprep.subr.bf16.mxu0 0
    %57 = vmatpush1.bf16.msra.mxu0 0
    %58 = vmatprep.subr.bf16.mxu0 0
    %59 = vmatpush1.bf16.msra.mxu0 0
    %60 = vmatprep.subr.bf16.mxu0 0
    %61 = vmatpush1.bf16.msra.mxu0 0
    %62 = vmatprep.subr.bf16.mxu0 0
    %63 = vmatpush1.bf16.msra.mxu0 0
    %64 = vmatprep.subr.bf16.mxu0 0
    %65 = vmatpush1.bf16.msra.mxu0 0
    %66 = vmatprep.subr.bf16.mxu0 0
    %67 = vmatpush1.bf16.msra.mxu0 0
    %68 = vmatprep.subr.bf16.mxu0 0
    %69 = vmatpush1.bf16.msra.mxu0 0
    %70 = vmatprep.subr.bf16.mxu0 0
    %71 = vmatpush1.bf16.msra.mxu0 0
    %72 = vmatprep.subr.bf16.mxu0 0
    %73 = vmatpush1.bf16.msra.mxu0 0
    %74 = vmatprep.subr.bf16.mxu0 0
    %75 = vmatpush1.bf16.msra.mxu0 0
    %76 = vmatprep.mubr.bf16.mxu0 0
    %77 = vmatmul.mubr.bf16.gmra.mrb[0].mxu0 %v42
    %v78 = vpop.f32.mrb[0].mxu0
    %v79 = vadd.f32 %v26, %v78
    %v80 = vpop.f32.mrb[0].mxu0
    %v81 = vpop.f32.mrb[0].mxu0
    %v82 = vpop.f32.mrb[0].mxu0
    %83 = vdwg.mxu0
    %v84 = vtanh.pop %v79
    %vm85 = vcmask 254976
    %86 = vst.msk [vmem:[#allocation2] sm:$0x3] %vm85, %v84
    // Predicated region
    $region14: #{bert_pooler.1} parent=1 // pred_check
      _
    $region15: #{bert_pooler.1} parent=1 // pred_check_branch
      %88 = sbr.rel (0) target = $region17
    $region16: #{bert_pooler.1} parent=1 // pred_region
      %s90 = ssub.s32 32, 32
      %91 = vsyncadd [#allocation3], %s90
      %s93 = sshll.u32 [#allocation2], 4
      %s94 = int_to_ptr.vmem [resolvable:$true] %s93
      %96 = dma.vmem_to_hbm [thread:$0]  %s94, 32, %s3, [#allocation3]
    $region17: #{bert_pooler.1} parent=1 // pred_fallthru
      _
    // Predicated region
    $region18: #{bert_pooler.1} parent=1 // pred_check
      _
    $region19: #{bert_pooler.1} parent=1 // pred_check_branch
      %98 = sbr.rel (0) target = $region21
    $region20: #{bert_pooler.1} parent=1 // pred_region
      %99 = dma.done [#allocation3], 32
    $region21: #{bert_pooler.1} parent=1 // pred_fallthru
      _
    %100 = vsyncpa [#allocation3], 1

</llo_original>
